<compile_context>
chip_gen: v6e
topology: v6e:2x2x1
jax: 0.10.0
libtpu: 0.0.40
codegen_flags: <defaults>
</compile_context>

<pallas_src>
import functools

import jax
import jax.numpy as jnp
from jax import lax
from jax.experimental import pallas as pl
from jax.experimental.pallas import tpu as pltpu

MATMUL_DTYPE = jnp.bfloat16     # jnp.float32 -> full-precision matmuls (v5e option)
APPROX_RECIPROCAL = True        # EUP vrcp for normalization denominators
_LANE = 128
_SUBLANE = 8


def _ceil_to(x, m):
    return (x + m - 1) // m * m


def _batch_plan(b, b_block=None):
    """Batch block size (sublane-packed for the matmul dtype) and padded batch."""
    row = 16 if MATMUL_DTYPE == jnp.bfloat16 else _SUBLANE
    if b_block is None:
        b_block = min(_ceil_to(b, row), 128)     # sweepable; fill MXU rows
    b_block = _ceil_to(b_block, row)
    b_pad = _ceil_to(max(b, b_block), b_block)
    return b_block, b_pad


def _recip(x):
    return pl.reciprocal(x, approx=APPROX_RECIPROCAL)


# --------------------------------------------------------------------------- #
# Hoisted, timestep-invariant copy gate: sigmoid(encoder_outputs @ Wc^T + bc). #
# --------------------------------------------------------------------------- #
def _copy_gate_kernel(enc_ref, copy_w_ref, copy_b_ref, copy_wt_ref):
    f32 = jnp.float32
    bb, l, Hp = enc_ref.shape
    # Once-per-sequence cost, so the 2D reshape here is negligible and kept for
    # robust Mosaic lowering (3D x 2D dot_general support varies).
    lin = (jnp.dot(enc_ref[...].reshape(bb * l, Hp), copy_w_ref[...],
                   preferred_element_type=f32) + copy_b_ref[...])
    copy_wt_ref[...] = jax.nn.sigmoid(lin).reshape(bb, l, Hp).astype(copy_wt_ref.dtype)


def precompute_copy_gate(params, encoder_outputs, *, b_block=None):
    """Call once per sequence; pass the result to every decode step."""
    b, l, H = encoder_outputs.shape
    Hp = params['copy_w'].shape[0]
    mm = MATMUL_DTYPE
    B_BLK, b_pad = _batch_plan(b, b_block)
    enc_p = jnp.pad(encoder_outputs,
                    ((0, b_pad - b), (0, 0), (0, Hp - H))).astype(mm)
    return pl.pallas_call(
        _copy_gate_kernel,
        out_shape=jax.ShapeDtypeStruct((b_pad, l, Hp), mm),
        grid=(b_pad // B_BLK,),
        in_specs=[pl.BlockSpec((B_BLK, l, Hp), lambda i: (i, 0, 0)),
                  pl.BlockSpec(params['copy_w'].shape, lambda i: (0, 0)),
                  pl.BlockSpec(params['copy_b'].shape, lambda i: (0, 0))],
        out_specs=pl.BlockSpec((B_BLK, l, Hp), lambda i: (i, 0, 0)),
        compiler_params=pltpu.CompilerParams(dimension_semantics=("parallel",)),
    )(enc_p, params['copy_w'], params['copy_b'])


# --------------------------------------------------------------------------- #
# Per-decode-step kernel.                                                      #
# --------------------------------------------------------------------------- #
def _copynet_step_kernel(input_id_ref, enc_ids_ref, xa_ref, enc_ref, copy_wt_ref,
                         h0_ref, c0_ref,
                         wxa0_ref, ws0_ref, whh0_ref, b0_ref,
                         wih1_ref, whh1_ref, b1_ref,
                         attn_w_ref, attn_b_ref,
                         comb_wa_ref, comb_wo_ref, comb_b_ref,
                         gen_w_ref, gen_b_ref,
                         out_ref, h_out_ref, c_out_ref, cur_attn_ref,
                         *, dec_vocab):
    f32 = jnp.float32
    neg_inf = jnp.float32(-jnp.inf)

    enc = enc_ref[...]                               # (bb, l, Hp), matmul dtype
    mm = enc.dtype
    bb, l, Hp = enc.shape
    vocab_pad = out_ref.shape[1]
    dvp = gen_b_ref.shape[1]                         # padded decoder vocab

    enc_ids = enc_ids_ref[...]                       # (bb, l) int32
    input_id = input_id_ref[...]                     # (bb, 1) int32
    enc_pad_mask = enc_ids == 0                      # (bb, l)

    # ---- selective read: rou = mask / sum(mask) (nan -> 0), rou @ enc --------
    match = (input_id == enc_ids).astype(f32)                        # (bb, l)
    match_sum = jnp.sum(match, axis=1, keepdims=True)                # (bb, 1)
    rou = match * _recip(jnp.where(match_sum > 0.0, match_sum, 1.0))
    selective = jnp.einsum('bql,blh->bqh', rou.astype(mm)[:, None, :], enc,
                           preferred_element_type=f32)[:, 0, :]      # (bb, Hp)

    # ---- 2-layer LSTM, single step (eval mode: dropout inactive) -------------
    # Per-gate dots (i, f, g, o blocks on 128-lane boundaries) so no (B, 4Hp)
    # f32 pre-activation stays live -> bounded vreg pressure at large B_BLK.
    def lstm_cell(parts, whh_ref, h_prev, b_ref, c_prev):
        def pre(g):
            lo, hi = g * Hp, (g + 1) * Hp
            acc = b_ref[:, lo:hi] + jnp.dot(h_prev, whh_ref[:, lo:hi],
                                            preferred_element_type=f32)
            for x, w_ref in parts:
                acc = acc + jnp.dot(x, w_ref[:, lo:hi], preferred_element_type=f32)
            return acc
        i_g = jax.nn.sigmoid(pre(0))
        f_g = jax.nn.sigmoid(pre(1))
        c_new = f_g * c_prev + i_g * jnp.tanh(pre(2))
        h_new = jax.nn.sigmoid(pre(3)) * jnp.tanh(c_new)
        return h_new, c_new

    # Layer 0 input columns are [embedding | attention] (pre-concatenated in the
    # wrapper) plus the in-kernel selective-read vector.
    h1, c1 = lstm_cell([(xa_ref[...], wxa0_ref), (selective.astype(mm), ws0_ref)],
                       whh0_ref, h0_ref[0], b0_ref, c0_ref[0])
    h2, c2 = lstm_cell([(h1.astype(mm), wih1_ref)],
                       whh1_ref, h0_ref[1], b1_ref, c0_ref[1])

    h_out_ref[0] = h1
    h_out_ref[1] = h2
    c_out_ref[0] = c1
    c_out_ref[1] = c2
    o = h2                                            # (bb, Hp) LSTM output
    o_mm = o.astype(mm)

    # ---- attention over encoder outputs (MXU einsums) ------------------------
    attn_o = (jnp.dot(o_mm, attn_w_ref[...], preferred_element_type=f32)
              + attn_b_ref[...])                                     # (bb, Hp)
    scores = jnp.einsum('bqh,blh->bql', attn_o.astype(mm)[:, None, :], enc,
                        preferred_element_type=f32)[:, 0, :]         # (bb, l)
    scores = jnp.where(enc_pad_mask, neg_inf, scores)
    m1 = jnp.max(scores, axis=1, keepdims=True)
    e1 = jnp.exp(scores - m1)
    attn_weights = e1 * _recip(jnp.sum(e1, axis=1, keepdims=True))
    attn_applied = jnp.einsum('bql,blh->bqh',
                              attn_weights.astype(mm)[:, None, :], enc,
                              preferred_element_type=f32)[:, 0, :]   # (bb, Hp)

    cur_attn = jnp.tanh(
        jnp.dot(attn_applied.astype(mm), comb_wa_ref[...], preferred_element_type=f32)
        + jnp.dot(o_mm, comb_wo_ref[...], preferred_element_type=f32)
        + comb_b_ref[...])                                           # (bb, Hp)
    cur_attn_ref[...] = cur_attn
    cur_attn_mm = cur_attn.astype(mm)

    # ---- generation score (padded columns masked out of the softmax) ---------
    gen_score = (jnp.dot(cur_attn_mm, gen_w_ref[...],
                         preferred_element_type=f32) + gen_b_ref[...])   # (bb, dvp)
    col = lax.broadcasted_iota(jnp.int32, (1, dvp), 1)
    gen_score = jnp.where(col < dec_vocab, gen_score, neg_inf)

    # ---- copy score (copy gate precomputed once per sequence, fed as input) ---
    copy_score = jnp.einsum('bqh,blh->bql', cur_attn_mm[:, None, :],
                            copy_wt_ref[...],
                            preferred_element_type=f32)[:, 0, :]     # (bb, l)
    copy_score = jnp.where(enc_pad_mask, neg_inf, copy_score)

    # ---- joint softmax over [generate | copy] without a lane concat -----------
    m2 = jnp.maximum(jnp.max(gen_score, axis=1, keepdims=True),
                     jnp.max(copy_score, axis=1, keepdims=True))
    e_gen = jnp.exp(gen_score - m2)
    e_copy = jnp.exp(copy_score - m2)
    inv_den = _recip(jnp.sum(e_gen, axis=1, keepdims=True)
                     + jnp.sum(e_copy, axis=1, keepdims=True))
    gen_p = e_gen * inv_den                                          # (bb, dvp)
    copy_p = e_copy * inv_den                                        # (bb, l)

    # ---- prob_c: scatter_add over the vocab axis, unrolled over l -------------
    # TODO(synk): for non-toy l, switch to a fori_loop / chunked one-hot einsum
    # to bound VALU work and vreg live ranges.
    iota_v = lax.broadcasted_iota(jnp.int32, (1, vocab_pad), 1)
    prob_c = jnp.zeros((bb, vocab_pad), f32)
    for j in range(l):                       # l is small & static -> unrolled
        prob_c = prob_c + jnp.where(iota_v == enc_ids[:, j:j + 1],
                                    copy_p[:, j:j + 1], 0.0)

    # ---- final log-prob: 0 -> -inf, nan -> -inf (matches the torch sequence) --
    def safe_log(p):
        pos = p > 0.0
        return jnp.where(pos, jnp.log(jnp.where(pos, p, 1.0)), neg_inf)

    out_ref[:, :dvp] = safe_log(prob_c[:, :dvp] + gen_p)     # gen_p written in place
    if vocab_pad > dvp:
        out_ref[:, dvp:] = safe_log(prob_c[:, dvp:])


# --------------------------------------------------------------------------- #
# Parameter preparation (PyTorch layout -> padded / transposed kernel layout). #
# --------------------------------------------------------------------------- #
def prepare_params(raw, *, embed_size, hidden_size, dec_vocab_size):
    """Gate blocks (i, f, g, o) are padded independently so in-kernel gate slices
    stay 128-lane aligned.  Layer-0 embedding+attention weights are fused into a
    single (Ep+Hp, 4Hp) block.  (num_layers is fixed at 2.)"""
    H = hidden_size
    Hp = _ceil_to(H, _LANE)
    Ep = _ceil_to(embed_size, _LANE)
    DVp = _ceil_to(dec_vocab_size, _LANE)
    mm = MATMUL_DTYPE
    f32 = jnp.float32

    def pad2(x, rows, cols):
        return jnp.pad(x, ((0, rows - x.shape[0]), (0, cols - x.shape[1])))

    def pad_gate_rows(w):                    # (4H, in) -> (4Hp, in), per-gate pad
        w = w.reshape(4, H, w.shape[1])
        w = jnp.pad(w, ((0, 0), (0, Hp - H), (0, 0)))
        return w.reshape(4 * Hp, -1)

    def pad_gate_bias(bias):                 # (4H,) -> (1, 4Hp), per-gate pad
        bias = bias.reshape(4, H)
        bias = jnp.pad(bias, ((0, 0), (0, Hp - H)))
        return bias.reshape(1, 4 * Hp)

    # layer-0 input columns are ordered [embedding | attention | selective_read]
    w0 = pad_gate_rows(raw['w_ih_l0'])
    wx0 = pad2(w0[:, :embed_size].T, Ep, 4 * Hp)
    wa0 = pad2(w0[:, embed_size:embed_size + H].T, Hp, 4 * Hp)
    ws0 = pad2(w0[:, embed_size + H:].T, Hp, 4 * Hp)
    wxa0 = jnp.concatenate([wx0, wa0], axis=0)          # (Ep+Hp, 4Hp) fused

    return dict(
        wxa0=wxa0.astype(mm),
        ws0=ws0.astype(mm),
        whh0=pad2(pad_gate_rows(raw['w_hh_l0']).T, Hp, 4 * Hp).astype(mm),
        b0=pad_gate_bias(raw['b_ih_l0'] + raw['b_hh_l0']).astype(f32),
        wih1=pad2(pad_gate_rows(raw['w_ih_l1']).T, Hp, 4 * Hp).astype(mm),
        whh1=pad2(pad_gate_rows(raw['w_hh_l1']).T, Hp, 4 * Hp).astype(mm),
        b1=pad_gate_bias(raw['b_ih_l1'] + raw['b_hh_l1']).astype(f32),
        attn_w=pad2(raw['attn_w'].T, Hp, Hp).astype(mm),
        attn_b=jnp.pad(raw['attn_b'], (0, Hp - H)).reshape(1, Hp).astype(f32),
        comb_wa=pad2(raw['comb_w'][:, :H].T, Hp, Hp).astype(mm),
        comb_wo=pad2(raw['comb_w'][:, H:].T, Hp, Hp).astype(mm),
        comb_b=jnp.pad(raw['comb_b'], (0, Hp - H)).reshape(1, Hp).astype(f32),
        gen_w=pad2(raw['gen_w'].T, Hp, DVp).astype(mm),
        gen_b=jnp.pad(raw['gen_b'],
                      (0, DVp - dec_vocab_size)).reshape(1, DVp).astype(f32),
        copy_w=pad2(raw['copy_w'].T, Hp, Hp).astype(mm),
        copy_b=jnp.pad(raw['copy_b'], (0, Hp - H)).reshape(1, Hp).astype(f32),
    )


# --------------------------------------------------------------------------- #
# Forward wrapper (single decode step, matching the PyTorch module's forward). #
# --------------------------------------------------------------------------- #
def copynet_forward(params, input_id, inp, encoder_outputs, encoder_input_ids,
                    hidden, attention, *, dec_vocab_size, vocab_size,
                    copy_gate=None, b_block=None):
    """Pure-JAX glue around the Pallas kernels.  `hidden` is (h0, c0).
    `copy_gate` (from precompute_copy_gate) should be reused across decode steps."""
    # TODO(synk): fusing the caller-side autoregressive timestep loop into one
    # pallas_call (T grid axis marked "arbitrary", weights + h/c/attn carried in
    # VMEM) is the biggest remaining lever, but it changes the single-step
    # forward interface of the module, so it is left to the decode driver.
    h0, c0 = hidden
    b, l, H = encoder_outputs.shape
    mm = MATMUL_DTYPE
    f32 = jnp.float32

    Hp = params['attn_w'].shape[0]
    EpHp = params['wxa0'].shape[0]                    # Ep + Hp
    Ep = EpHp - Hp
    DVp = params['gen_w'].shape[1]
    Vp = max(_ceil_to(vocab_size, _LANE), DVp)
    B_BLK, b_pad = _batch_plan(b, b_block)

    def pad(x, shape, dtype):
        pads = tuple((0, t - s) for s, t in zip(x.shape, shape))
        return jnp.pad(x, pads).astype(dtype)

    if copy_gate is None:
        copy_gate = precompute_copy_gate(params, encoder_outputs, b_block=b_block)
    if copy_gate.shape[0] >= b_pad:
        cg = copy_gate[:b_pad]
    else:
        cg = pad(copy_gate, (b_pad, l, Hp), copy_gate.dtype)
    cg = cg.astype(mm)

    input_id_p = pad(input_id.astype(jnp.int32), (b_pad, 1), jnp.int32)
    enc_ids_p = pad(encoder_input_ids.astype(jnp.int32), (b_pad, l), jnp.int32)
    # Pre-concatenated [embedded input | previous attention] operand.
    x2 = pad(inp.reshape(b, -1), (b_pad, Ep), f32)
    a2 = pad(attention.reshape(b, H), (b_pad, Hp), f32)
    xa_p = jnp.concatenate([x2, a2], axis=1).astype(mm)
    enc_p = pad(encoder_outputs, (b_pad, l, Hp), mm)
    h0_p = pad(h0, (2, b_pad, Hp), mm)
    c0_p = pad(c0, (2, b_pad, Hp), f32)

    weight_names = ('wxa0', 'ws0', 'whh0', 'b0',
                    'wih1', 'whh1', 'b1',
                    'attn_w', 'attn_b',
                    'comb_wa', 'comb_wo', 'comb_b',
                    'gen_w', 'gen_b')
    weights = tuple(params[n] for n in weight_names)

    batch_specs = [
        pl.BlockSpec((B_BLK, 1), lambda i: (i, 0)),            # input_id
        pl.BlockSpec((B_BLK, l), lambda i: (i, 0)),            # encoder_input_ids
        pl.BlockSpec((B_BLK, EpHp), lambda i: (i, 0)),         # [embed | attention]
        pl.BlockSpec((B_BLK, l, Hp), lambda i: (i, 0, 0)),     # encoder_outputs
        pl.BlockSpec((B_BLK, l, Hp), lambda i: (i, 0, 0)),     # precomputed copy gate
        pl.BlockSpec((2, B_BLK, Hp), lambda i: (0, i, 0)),     # h0
        pl.BlockSpec((2, B_BLK, Hp), lambda i: (0, i, 0)),     # c0
    ]
    # Weights: full array, constant block index -> VMEM-resident across the grid.
    # TODO(synk): single-buffer the constant-index weight specs (pl.Buffered(1))
    # and tile gen_w along DVp once dec_vocab reaches production size (v7x VMEM).
    weight_specs = [pl.BlockSpec(w.shape, lambda i, n=w.ndim: (0,) * n)
                    for w in weights]

    out_shapes = (
        jax.ShapeDtypeStruct((b_pad, Vp), f32),
        jax.ShapeDtypeStruct((2, b_pad, Hp), f32),
        jax.ShapeDtypeStruct((2, b_pad, Hp), f32),
        jax.ShapeDtypeStruct((b_pad, Hp), f32),
    )
    out_specs = (
        pl.BlockSpec((B_BLK, Vp), lambda i: (i, 0)),
        pl.BlockSpec((2, B_BLK, Hp), lambda i: (0, i, 0)),
        pl.BlockSpec((2, B_BLK, Hp), lambda i: (0, i, 0)),
        pl.BlockSpec((B_BLK, Hp), lambda i: (i, 0)),
    )

    # Explicit VMEM budget: weights (double-buffered by default) + per-block
    # activations/outputs (double-buffered) + headroom, floored at 32 MiB.
    grid_steps = b_pad // B_BLK
    weight_bytes = sum(int(w.size) * w.dtype.itemsize for w in weights)
    act_bytes = sum(int(x.size) * x.dtype.itemsize for x in
                    (input_id_p, enc_ids_p, xa_p, enc_p, cg, h0_p, c0_p)) // grid_steps
    out_bytes = (b_pad * Vp + 5 * b_pad * Hp) * 4 // grid_steps
    vmem_limit = int(min(max(2 * weight_bytes + 2 * (act_bytes + out_bytes) + (8 << 20),
                             32 << 20), 128 << 20))

    kernel = functools.partial(_copynet_step_kernel, dec_vocab=dec_vocab_size)

    output_p, h_out_p, c_out_p, cur_attn_p = pl.pallas_call(
        kernel,
        out_shape=out_shapes,
        grid=(grid_steps,),
        in_specs=batch_specs + weight_specs,
        out_specs=out_specs,
        compiler_params=pltpu.CompilerParams(
            dimension_semantics=("parallel",),
            vmem_limit_bytes=vmem_limit),
    )(input_id_p, enc_ids_p, xa_p, enc_p, cg, h0_p, c0_p, *weights)

    # Slice back to the logical (unpadded) PyTorch return shapes.
    output = output_p[:b, :vocab_size]
    cur_hidden = (h_out_p[:, :b, :H], c_out_p[:, :b, :H])
    cur_attention = cur_attn_p[:b, :H].reshape(b, 1, H)
    return output, cur_hidden, cur_attention


if __name__ == "__main__":
    key = jax.random.PRNGKey(0)
    b, l = 2, 8
    embed, H = 32, 32
    dec_vocab, vocab = 16, 24
    num_layers = 2

    ks = jax.random.split(key, 24)

    def u(k, shape, scale=0.1):
        return jax.random.uniform(k, shape, jnp.float32, -scale, scale)

    # Raw parameters in PyTorch layout (W_ih: (4H, in), Linear W: (out, in), ...)
    raw = dict(
        w_ih_l0=u(ks[0], (4 * H, 2 * H + embed)),
        w_hh_l0=u(ks[1], (4 * H, H)),
        b_ih_l0=u(ks[2], (4 * H,)),
        b_hh_l0=u(ks[3], (4 * H,)),
        w_ih_l1=u(ks[4], (4 * H, H)),
        w_hh_l1=u(ks[5], (4 * H, H)),
        b_ih_l1=u(ks[6], (4 * H,)),
        b_hh_l1=u(ks[7], (4 * H,)),
        attn_w=u(ks[8], (H, H)),
        attn_b=u(ks[9], (H,)),
        comb_w=u(ks[10], (H, 2 * H)),
        comb_b=u(ks[11], (H,)),
        gen_w=u(ks[12], (dec_vocab, H)),
        gen_b=u(ks[13], (dec_vocab,)),
        copy_w=u(ks[14], (H, H)),
        copy_b=u(ks[15], (H,)),
    )
    params = prepare_params(raw, embed_size=embed, hidden_size=H,
                            dec_vocab_size=dec_vocab)

    input_id = jax.random.randint(ks[16], (b, 1), 0, vocab, jnp.int32)
    encoder_input_ids = jax.random.randint(ks[17], (b, l), 0, vocab, jnp.int32)
    inp = u(ks[18], (b, 1, embed), 1.0)
    encoder_outputs = u(ks[19], (b, l, H), 1.0)
    attention = u(ks[20], (b, 1, H), 1.0)
    h0 = u(ks[21], (num_layers, b, H), 1.0)
    c0 = u(ks[22], (num_layers, b, H), 1.0)

    # TODO(synk): nn.LSTM inter-layer dropout (training-mode only) is not modeled.
    # Hoisted once-per-sequence copy gate, then one decode step.
    copy_gate = precompute_copy_gate(params, encoder_outputs)
    output, cur_hidden, cur_attention = copynet_forward(
        params, input_id, inp, encoder_outputs, encoder_input_ids,
        (h0, c0), attention, dec_vocab_size=dec_vocab, vocab_size=vocab,
        copy_gate=copy_gate)

    jax.block_until_ready((output, cur_hidden, cur_attention))
    assert output.shape == (b, vocab)
    assert cur_hidden[0].shape == (num_layers, b, H)
    assert cur_hidden[1].shape == (num_layers, b, H)
    assert cur_attention.shape == (b, 1, H)
    print("KERNEL_OK")
</pallas_src>

<mosaic_0001>
module attributes {stable_mosaic.version = 11 : i64} {
  func.func @_copy_gate_kernel(%arg0: i32, %arg1: memref<16x8x128xbf16, #tpu.memory_space<vmem>>, %arg2: memref<128x128xbf16, #tpu.memory_space<vmem>>, %arg3: memref<1x128xf32, #tpu.memory_space<vmem>>, %arg4: memref<16x8x128xbf16, #tpu.memory_space<vmem>>) attributes {dimension_semantics = [#tpu.dimension_semantics<parallel>], iteration_bounds = array<i64: 1>, scalar_prefetch = 0 : i64, scratch_operands = 0 : i64, tpu.core_type = #tpu.core_type<tc>, window_params = [{transform_indices = @transform_0, window_bounds = array<i64: 16, 8, 128>}, {pipeline_mode = #tpu.pipeline_mode<synchronous>, transform_indices = @transform_1, window_bounds = array<i64: 128, 128>}, {pipeline_mode = #tpu.pipeline_mode<synchronous>, transform_indices = @transform_2, window_bounds = array<i64: 1, 128>}, {transform_indices = @transform_3, window_bounds = array<i64: 16, 8, 128>}]} {
    %c0 = arith.constant 0 : index
    %c0_0 = arith.constant 0 : index
    %c0_1 = arith.constant 0 : index
    %0 = vector.load %arg1[%c0, %c0_0, %c0_1] : memref<16x8x128xbf16, #tpu.memory_space<vmem>>, vector<16x8x128xbf16>
    %1 = vector.shape_cast %0 : vector<16x8x128xbf16> to vector<128x128xbf16>
    %c0_2 = arith.constant 0 : index
    %c0_3 = arith.constant 0 : index
    %2 = vector.load %arg2[%c0_2, %c0_3] : memref<128x128xbf16, #tpu.memory_space<vmem>>, vector<128x128xbf16>
    %cst = arith.constant dense<0.000000e+00> : vector<128x128xf32>
    %3 = tpu.matmul %1, %2, %cst {dimension_numbers = #tpu.dot_dimension_numbers<[1], [0], [0], [1], [0, 0, 1, 1], [], []>} : vector<128x128xbf16>, vector<128x128xbf16>, vector<128x128xf32> -> vector<128x128xf32>
    %c0_4 = arith.constant 0 : index
    %c0_5 = arith.constant 0 : index
    %4 = vector.load %arg3[%c0_4, %c0_5] : memref<1x128xf32, #tpu.memory_space<vmem>>, vector<1x128xf32>
    %5 = vector.broadcast %4 : vector<1x128xf32> to vector<128x128xf32>
    %6 = arith.addf %3, %5 : vector<128x128xf32>
    %7 = arith.negf %6 : vector<128x128xf32>
    %8 = math.exp %7 : vector<128x128xf32>
    %cst_6 = arith.constant 1.000000e+00 : f32
    %9 = vector.broadcast %cst_6 : f32 to vector<128x128xf32>
    %10 = arith.addf %9, %8 : vector<128x128xf32>
    %11 = arith.divf %9, %10 : vector<128x128xf32>
    %12 = vector.shape_cast %11 : vector<128x128xf32> to vector<16x8x128xf32>
    %13 = arith.truncf %12 : vector<16x8x128xf32> to vector<16x8x128xbf16>
    %c0_7 = arith.constant 0 : index
    %c0_8 = arith.constant 0 : index
    %c0_9 = arith.constant 0 : index
    %14 = vector.load %arg4[%c0_7, %c0_8, %c0_9] : memref<16x8x128xbf16, #tpu.memory_space<vmem>>, vector<16x8x128xbf16>
    tpu.vector_store %arg4[%c0_7, %c0_8, %c0_9], %13 {strides = array<i32>} : memref<16x8x128xbf16, #tpu.memory_space<vmem>>, vector<16x8x128xbf16>,
    return
  }
  func.func @transform_0(%arg0: i32) -> (i32, i32, i32) {
    %c0_i32 = arith.constant 0 : i32
    %c0_i32_0 = arith.constant 0 : i32
    %c0_i32_1 = arith.constant 0 : i32
    return %arg0, %c0_i32, %c0_i32_0 : i32, i32, i32
  }
  func.func @transform_1(%arg0: i32) -> (i32, i32) {
    %c0_i32 = arith.constant 0 : i32
    %c0_i32_0 = arith.constant 0 : i32
    %c0_i32_1 = arith.constant 0 : i32
    return %c0_i32, %c0_i32_0 : i32, i32
  }
  func.func @transform_2(%arg0: i32) -> (i32, i32) {
    %c0_i32 = arith.constant 0 : i32
    %c0_i32_0 = arith.constant 0 : i32
    %c0_i32_1 = arith.constant 0 : i32
    return %c0_i32, %c0_i32_0 : i32, i32
  }
  func.func @transform_3(%arg0: i32) -> (i32, i32, i32) {
    %c0_i32 = arith.constant 0 : i32
    %c0_i32_0 = arith.constant 0 : i32
    %c0_i32_1 = arith.constant 0 : i32
    return %arg0, %c0_i32, %c0_i32_0 : i32, i32, i32
  }
}

</mosaic_0001>

<llo_original>
// kernel: tpu_custom_call.1
$region0: #{tpu_custom_call.1}
  #allocation0 [shape = 'u32[]', space=smem, size = 0x4, offset = 0x4, fixed_abs, tag = 'smem constant byte address 0x4 - core index']
  #allocation1 [shape = 'u32[144,128]{1,0:T(1,128)}', space=vmem, size = 0x12000, scoped, tag = 'internal scratch']
  %s0 = inlined_call_operand.hbm [shape: bf16[16,8,128], index: 0, kind: input, shape index: {}]
  %s1 = inlined_call_operand.hbm [shape: bf16[128,128], index: 1, kind: input, shape index: {}]
  %s2 = inlined_call_operand.vmem [shape: f32[1,128], index: 2, kind: input, shape index: {}]
  %s3 = inlined_call_operand.hbm [shape: bf16[16,8,128], index: 3, kind: output, shape index: {}]
  %s4 = sld [smem:[#allocation0]]
  $region30: #{tpu_custom_call.1} parent=0
    _
  %s6 = ssub.s32 1, %s4
  %s7 = scalar_select 0, %s6, %s4
  $region1: #{tpu_custom_call.1} parent=0
    #allocation2 [shape = 'u8[32768]{0}', space=vmem, size = 0x8000, scoped, tag = 'input window, operand 0, single buffered']
    #allocation3 [shape = 's32[1]{0}', space=sflag, size = 0x4, scoped, tag = 'scoped memory for tpu_custom_call.1']
    #allocation4 [shape = 's32[1]{0}', space=sflag, size = 0x4, scoped, tag = 'scoped memory for tpu_custom_call.1']
    #allocation5 [shape = 'u8[32768]{0}', space=vmem, size = 0x8000, scoped, tag = 'input window, operand 1, single buffered']
    #allocation6 [shape = 's32[1]{0}', space=sflag, size = 0x4, scoped, tag = 'scoped memory for tpu_custom_call.1']
    #allocation7 [shape = 'u8[32768]{0}', space=vmem, size = 0x8000, scoped, tag = 'output window, operand 0, single buffered']
    %8 = vsyncpa [#allocation3], 0
    %9 = vsyncpa [#allocation6], 0
    %10 = vsyncpa [#allocation4], 0
    // Predicated region
    $region2: #{tpu_custom_call.1} parent=1 // pred_check
      _
    $region3: #{tpu_custom_call.1} parent=1 // pred_check_branch
      %12 = sbr.rel (0) target = $region5
    $region4: #{tpu_custom_call.1} parent=1 // pred_region
      %s14 = ssub.s32 1024, 1024
      %15 = vsyncadd [#allocation3], %s14
      %s16 = sshll.u32 [#allocation2], 4
      %s17 = int_to_ptr.vmem [resolvable:$true] %s16
      %22 = dma.hbm_to_vmem [thread:$0]  %s0, 1024, %s17, [#allocation3], 64, 64, 4
    $region5: #{tpu_custom_call.1} parent=1 // pred_fallthru
      _
    // Predicated region
    $region6: #{tpu_custom_call.1} parent=1 // pred_check
      _
    $region7: #{tpu_custom_call.1} parent=1 // pred_check_branch
      %24 = sbr.rel (0) target = $region9
    $region8: #{tpu_custom_call.1} parent=1 // pred_region
      %s26 = ssub.s32 1024, 1024
      %27 = vsyncadd [#allocation6], %s26
      %s28 = sshll.u32 [#allocation5], 4
      %s29 = int_to_ptr.vmem [resolvable:$true] %s28
      %34 = dma.hbm_to_vmem [thread:$0]  %s1, 1024, %s29, [#allocation6], 64, 64, 4
    $region9: #{tpu_custom_call.1} parent=1 // pred_fallthru
      _
    // Predicated region
    $region10: #{tpu_custom_call.1} parent=1 // pred_check
      _
    $region11: #{tpu_custom_call.1} parent=1 // pred_check_branch
      %36 = sbr.rel (0) target = $region13
    $region12: #{tpu_custom_call.1} parent=1 // pred_region
      _
    $region13: #{tpu_custom_call.1} parent=1 // pred_fallthru
      _
    // Predicated region
    $region14: #{tpu_custom_call.1} parent=1 // pred_check
      _
    $region15: #{tpu_custom_call.1} parent=1 // pred_check_branch
      %38 = sbr.rel (0) target = $region17
    $region16: #{tpu_custom_call.1} parent=1 // pred_region
      %39 = dma.done [#allocation3], 1024
    $region17: #{tpu_custom_call.1} parent=1 // pred_fallthru
      _
    // Predicated region
    $region18: #{tpu_custom_call.1} parent=1 // pred_check
      _
    $region19: #{tpu_custom_call.1} parent=1 // pred_check_branch
      %41 = sbr.rel (0) target = $region21
    $region20: #{tpu_custom_call.1} parent=1 // pred_region
      %42 = dma.done [#allocation6], 1024
    $region21: #{tpu_custom_call.1} parent=1 // pred_fallthru
      _
    %v44 = vld [vmem:[#allocation2] sm:$0xf]
    %v45 = vld [vmem:[#allocation2 + $0x4] sm:$0xf]
    %v46 = vld [vmem:[#allocation2 + $0x8] sm:$0xf]
    %v47 = vld [vmem:[#allocation2 + $0xc] sm:$0xf]
    %v48 = vld [vmem:[#allocation2 + $0x10] sm:$0xf]
    %v49 = vld [vmem:[#allocation2 + $0x14] sm:$0xf]
    %v50 = vld [vmem:[#allocation2 + $0x18] sm:$0xf]
    %v51 = vld [vmem:[#allocation2 + $0x1c] sm:$0xf]
    %v52 = vld [vmem:[#allocation2 + $0x20] sm:$0xf]
    %v53 = vld [vmem:[#allocation2 + $0x24] sm:$0xf]
    %v54 = vld [vmem:[#allocation2 + $0x28] sm:$0xf]
    %v55 = vld [vmem:[#allocation2 + $0x2c] sm:$0xf]
    %v56 = vld [vmem:[#allocation2 + $0x30] sm:$0xf]
    %v57 = vld [vmem:[#allocation2 + $0x34] sm:$0xf]
    %v58 = vld [vmem:[#allocation2 + $0x38] sm:$0xf]
    %v59 = vld [vmem:[#allocation2 + $0x3c] sm:$0xf]
    %v60 = vld [vmem:[#allocation5] sm:$0xf]
    %v61 = vld [vmem:[#allocation5 + $0x4] sm:$0xf]
    %v62 = vld [vmem:[#allocation5 + $0x8] sm:$0xf]
    %v63 = vld [vmem:[#allocation5 + $0xc] sm:$0xf]
    %v64 = vld [vmem:[#allocation5 + $0x10] sm:$0xf]
    %v65 = vld [vmem:[#allocation5 + $0x14] sm:$0xf]
    %v66 = vld [vmem:[#allocation5 + $0x18] sm:$0xf]
    %v67 = vld [vmem:[#allocation5 + $0x1c] sm:$0xf]
    %v68 = vld [vmem:[#allocation5 + $0x20] sm:$0xf]
    %v69 = vld [vmem:[#allocation5 + $0x24] sm:$0xf]
    %v70 = vld [vmem:[#allocation5 + $0x28] sm:$0xf]
    %v71 = vld [vmem:[#allocation5 + $0x2c] sm:$0xf]
    %v72 = vld [vmem:[#allocation5 + $0x30] sm:$0xf]
    %v73 = vld [vmem:[#allocation5 + $0x34] sm:$0xf]
    %v74 = vld [vmem:[#allocation5 + $0x38] sm:$0xf]
    %v75 = vld [vmem:[#allocation5 + $0x3c] sm:$0xf]
    %v76 = vld [vmem:[%s2] sm:$0x1]
    %v78 = vlaneseq
    %v79 = vshrl.u32 %v78, 7
    %v80 = vsub.s32 0, %v79
    %v81 = vrot.slane %v76, %v80
    %v99 = vunpack.c.l.b16 %v44
    %v100 = vunpack.c.l.b16 %v45
    %v101 = vunpack.c.l.b16 %v46
    %v102 = vunpack.c.l.b16 %v47
    %v103 = vunpack.c.l.b16 %v48
    %v104 = vunpack.c.l.b16 %v49
    %v105 = vunpack.c.l.b16 %v50
    %v106 = vunpack.c.l.b16 %v51
    %v107 = vunpack.c.l.b16 %v52
    %v108 = vunpack.c.l.b16 %v53
    %v109 = vunpack.c.l.b16 %v54
    %v110 = vunpack.c.l.b16 %v55
    %v111 = vunpack.c.l.b16 %v56
    %v112 = vunpack.c.l.b16 %v57
    %v113 = vunpack.c.l.b16 %v58
    %v114 = vunpack.c.l.b16 %v59
    %v115 = vpack.c.b16 %v100, %v99
    %v116 = vpack.c.b16 %v102, %v101
    %v117 = vpack.c.b16 %v104, %v103
    %v118 = vpack.c.b16 %v106, %v105
    %v119 = vpack.c.b16 %v108, %v107
    %v120 = vpack.c.b16 %v110, %v109
    %v121 = vpack.c.b16 %v112, %v111
    %v122 = vpack.c.b16 %v114, %v113
    %v147 = vunpack.c.l.b16 %v60
    %v148 = vunpack.c.l.b16 %v61
    %v149 = vunpack.c.l.b16 %v62
    %v150 = vunpack.c.l.b16 %v63
    %v151 = vunpack.c.l.b16 %v64
    %v152 = vunpack.c.l.b16 %v65
    %v153 = vunpack.c.l.b16 %v66
    %v154 = vunpack.c.l.b16 %v67
    %v155 = vunpack.c.l.b16 %v68
    %v156 = vunpack.c.l.b16 %v69
    %v157 = vunpack.c.l.b16 %v70
    %v158 = vunpack.c.l.b16 %v71
    %v159 = vunpack.c.l.b16 %v72
    %v160 = vunpack.c.l.b16 %v73
    %v161 = vunpack.c.l.b16 %v74
    %v162 = vunpack.c.l.b16 %v75
    %v163 = vpack.c.b16 %v148, %v147
    %v164 = vpack.c.b16 %v150, %v149
    %v165 = vpack.c.b16 %v152, %v151
    %v166 = vpack.c.b16 %v154, %v153
    %v167 = vpack.c.b16 %v156, %v155
    %v168 = vpack.c.b16 %v158, %v157
    %v169 = vpack.c.b16 %v160, %v159
    %v170 = vpack.c.b16 %v162, %v161
    %179 = vmatprep.subr.bf16.mxu0 0
    %180 = vmatpush1.bf16.msra.mxu0 %v170
    %181 = vmatprep.subr.bf16.mxu0 0
    %182 = vmatpush1.bf16.msra.mxu0 %v169
    %183 = vmatprep.subr.bf16.mxu0 0
    %184 = vmatpush1.bf16.msra.mxu0 %v168
    %185 = vmatprep.subr.bf16.mxu0 0
    %186 = vmatpush1.bf16.msra.mxu0 %v167
    %187 = vmatprep.subr.bf16.mxu0 0
    %188 = vmatpush1.bf16.msra.mxu0 %v166
    %189 = vmatprep.subr.bf16.mxu0 0
    %190 = vmatpush1.bf16.msra.mxu0 %v165
    %191 = vmatprep.subr.bf16.mxu0 0
    %192 = vmatpush1.bf16.msra.mxu0 %v164
    %193 = vmatprep.subr.bf16.mxu0 0
    %194 = vmatpush1.bf16.msra.mxu0 %v163
    %195 = vmatprep.subr.bf16.mxu0 0
    %196 = vmatpush2.bf16.msra.mxu0 0
    %197 = vmatprep.subr.bf16.mxu0 0
    %198 = vmatpush2.bf16.msra.mxu0 0
    %199 = vmatprep.subr.bf16.mxu0 0
    %200 = vmatpush2.bf16.msra.mxu0 0
    %201 = vmatprep.subr.bf16.mxu0 0
    %202 = vmatpush2.bf16.msra.mxu0 0
    %203 = vmatprep.subr.bf16.mxu0 0
    %204 = vmatpush2.bf16.msra.mxu0 0
    %205 = vmatprep.subr.bf16.mxu0 0
    %206 = vmatpush2.bf16.msra.mxu0 0
    %207 = vmatprep.subr.bf16.mxu0 0
    %208 = vmatpush2.bf16.msra.mxu0 0
    %209 = vmatprep.subr.bf16.mxu0 0
    %210 = vmatpush2.bf16.msra.mxu0 0
    %211 = vmatprep.mubr.bf16.mxu0 0
    %212 = vmatmul.mubr.bf16.gmra.mxu0 %v115
    %v213 = vpop.f32.mrf.mxu0
    %v214 = vadd.f32 %v81, %v213
    %v215 = vpop.f32.mrf.mxu0
    %v216 = vpop.f32.mrf.mxu0
    %v217 = vadd.f32 %v81, %v216
    %v218 = vpop.f32.mrf.mxu0
    %219 = vmatprep.mubr.bf16.mxu0 0
    %220 = vmatmul.mubr.bf16.gmra.mxu0 %v116
    %v221 = vpop.f32.mrf.mxu0
    %v222 = vadd.f32 %v81, %v221
    %v223 = vpop.f32.mrf.mxu0
    %v224 = vpop.f32.mrf.mxu0
    %v225 = vadd.f32 %v81, %v224
    %v226 = vpop.f32.mrf.mxu0
    %227 = vmatprep.mubr.bf16.mxu0 0
    %228 = vmatmul.mubr.bf16.gmra.mxu0 %v117
    %v229 = vpop.f32.mrf.mxu0
    %v230 = vadd.f32 %v81, %v229
    %v231 = vpop.f32.mrf.mxu0
    %v232 = vpop.f32.mrf.mxu0
    %v233 = vadd.f32 %v81, %v232
    %v234 = vpop.f32.mrf.mxu0
    %235 = vmatprep.mubr.bf16.mxu0 0
    %236 = vmatmul.mubr.bf16.gmra.mxu0 %v118
    %v237 = vpop.f32.mrf.mxu0
    %v238 = vadd.f32 %v81, %v237
    %v239 = vpop.f32.mrf.mxu0
    %v240 = vpop.f32.mrf.mxu0
    %v241 = vadd.f32 %v81, %v240
    %v242 = vpop.f32.mrf.mxu0
    %243 = vmatprep.mubr.bf16.mxu0 0
    %244 = vmatmul.mubr.bf16.gmra.mxu0 %v119
    %v245 = vpop.f32.mrf.mxu0
    %v246 = vadd.f32 %v81, %v245
    %v247 = vpop.f32.mrf.mxu0
    %v248 = vpop.f32.mrf.mxu0
    %v249 = vadd.f32 %v81, %v248
    %v250 = vpop.f32.mrf.mxu0
    %251 = vmatprep.mubr.bf16.mxu0 0
    %252 = vmatmul.mubr.bf16.gmra.mxu0 %v120
    %v253 = vpop.f32.mrf.mxu0
    %v254 = vadd.f32 %v81, %v253
    %v255 = vpop.f32.mrf.mxu0
    %v256 = vpop.f32.mrf.mxu0
    %v257 = vadd.f32 %v81, %v256
    %v258 = vpop.f32.mrf.mxu0
    %259 = vmatprep.mubr.bf16.mxu0 0
    %260 = vmatmul.mubr.bf16.gmra.mxu0 %v121
    %v261 = vpop.f32.mrf.mxu0
    %v262 = vadd.f32 %v81, %v261
    %v263 = vpop.f32.mrf.mxu0
    %v264 = vpop.f32.mrf.mxu0
    %v265 = vadd.f32 %v81, %v264
    %v266 = vpop.f32.mrf.mxu0
    %267 = vmatprep.mubr.bf16.mxu0 0
    %268 = vmatmul.mubr.bf16.gmra.mxu0 %v122
    %v269 = vpop.f32.mrf.mxu0
    %v270 = vadd.f32 %v81, %v269
    %v271 = vpop.f32.mrf.mxu0
    %v272 = vpop.f32.mrf.mxu0
    %v273 = vadd.f32 %v81, %v272
    %v274 = vpop.f32.mrf.mxu0
    %275 = vdwg.mxu0
    %v276 = vxor.u32 %v214, 2147483648
    %v277 = vxor.u32 %v217, 2147483648
    %v278 = vxor.u32 %v222, 2147483648
    %v279 = vxor.u32 %v225, 2147483648
    %v280 = vxor.u32 %v230, 2147483648
    %v281 = vxor.u32 %v233, 2147483648
    %v282 = vxor.u32 %v238, 2147483648
    %v283 = vxor.u32 %v241, 2147483648
    %v284 = vxor.u32 %v246, 2147483648
    %v285 = vxor.u32 %v249, 2147483648
    %v286 = vxor.u32 %v254, 2147483648
    %v287 = vxor.u32 %v257, 2147483648
    %v288 = vxor.u32 %v262, 2147483648
    %v289 = vxor.u32 %v265, 2147483648
    %v290 = vxor.u32 %v270, 2147483648
    %v291 = vxor.u32 %v273, 2147483648
    %v292 = vmul.f32 %v276, 1.442695
    %v293 = vpow.pop %v292
    %v294 = vmul.f32 %v277, 1.442695
    %v295 = vpow.pop %v294
    %v296 = vmul.f32 %v278, 1.442695
    %v297 = vpow.pop %v296
    %v298 = vmul.f32 %v279, 1.442695
    %v299 = vpow.pop %v298
    %v300 = vmul.f32 %v280, 1.442695
    %v301 = vpow.pop %v300
    %v302 = vmul.f32 %v281, 1.442695
    %v303 = vpow.pop %v302
    %v304 = vmul.f32 %v282, 1.442695
    %v305 = vpow.pop %v304
    %v306 = vmul.f32 %v283, 1.442695
    %v307 = vpow.pop %v306
    %v308 = vmul.f32 %v284, 1.442695
    %v309 = vpow.pop %v308
    %v310 = vmul.f32 %v285, 1.442695
    %v311 = vpow.pop %v310
    %v312 = vmul.f32 %v286, 1.442695
    %v313 = vpow.pop %v312
    %v314 = vmul.f32 %v287, 1.442695
    %v315 = vpow.pop %v314
    %v316 = vmul.f32 %v288, 1.442695
    %v317 = vpow.pop %v316
    %v318 = vmul.f32 %v289, 1.442695
    %v319 = vpow.pop %v318
    %v320 = vmul.f32 %v290, 1.442695
    %v321 = vpow.pop %v320
    %v322 = vmul.f32 %v291, 1.442695
    %v323 = vpow.pop %v322
    %v324 = vadd.f32 %v293, 1.0
    %v325 = vadd.f32 %v295, 1.0
    %v326 = vadd.f32 %v297, 1.0
    %v327 = vadd.f32 %v299, 1.0
    %v328 = vadd.f32 %v301, 1.0
    %v329 = vadd.f32 %v303, 1.0
    %v330 = vadd.f32 %v305, 1.0
    %v331 = vadd.f32 %v307, 1.0
    %v332 = vadd.f32 %v309, 1.0
    %v333 = vadd.f32 %v311, 1.0
    %v334 = vadd.f32 %v313, 1.0
    %v335 = vadd.f32 %v315, 1.0
    %v336 = vadd.f32 %v317, 1.0
    %v337 = vadd.f32 %v319, 1.0
    %v338 = vadd.f32 %v321, 1.0
    %v339 = vadd.f32 %v323, 1.0
    %v340 = vrcp.pop %v324
    %v341 = vmul.f32 1.0, %v340
    %v342 = vrcp.pop %v325
    %v343 = vmul.f32 1.0, %v342
    %v344 = vrcp.pop %v326
    %v345 = vmul.f32 1.0, %v344
    %v346 = vrcp.pop %v327
    %v347 = vmul.f32 1.0, %v346
    %v348 = vrcp.pop %v328
    %v349 = vmul.f32 1.0, %v348
    %v350 = vrcp.pop %v329
    %v351 = vmul.f32 1.0, %v350
    %v352 = vrcp.pop %v330
    %v353 = vmul.f32 1.0, %v352
    %v354 = vrcp.pop %v331
    %v355 = vmul.f32 1.0, %v354
    %v356 = vrcp.pop %v332
    %v357 = vmul.f32 1.0, %v356
    %v358 = vrcp.pop %v333
    %v359 = vmul.f32 1.0, %v358
    %v360 = vrcp.pop %v334
    %v361 = vmul.f32 1.0, %v360
    %v362 = vrcp.pop %v335
    %v363 = vmul.f32 1.0, %v362
    %v364 = vrcp.pop %v336
    %v365 = vmul.f32 1.0, %v364
    %v366 = vrcp.pop %v337
    %v367 = vmul.f32 1.0, %v366
    %v368 = vrcp.pop %v338
    %v369 = vmul.f32 1.0, %v368
    %v370 = vrcp.pop %v339
    %v371 = vmul.f32 1.0, %v370
    %v372 = vpack.c.bf16 %v341, %v341
    %v373 = vpack.c.bf16 %v343, %v343
    %v374 = vpack.c.bf16 %v345, %v345
    %v375 = vpack.c.bf16 %v347, %v347
    %v376 = vpack.c.bf16 %v349, %v349
    %v377 = vpack.c.bf16 %v351, %v351
    %v378 = vpack.c.bf16 %v353, %v353
    %v379 = vpack.c.bf16 %v355, %v355
    %v380 = vpack.c.bf16 %v357, %v357
    %v381 = vpack.c.bf16 %v359, %v359
    %v382 = vpack.c.bf16 %v361, %v361
    %v383 = vpack.c.bf16 %v363, %v363
    %v384 = vpack.c.bf16 %v365, %v365
    %v385 = vpack.c.bf16 %v367, %v367
    %v386 = vpack.c.bf16 %v369, %v369
    %v387 = vpack.c.bf16 %v371, %v371
    %388 = vst [vmem:[#allocation7] sm:$0xf] %v372
    %389 = vst [vmem:[#allocation7 + $0x4] sm:$0xf] %v373
    %390 = vst [vmem:[#allocation7 + $0x8] sm:$0xf] %v374
    %391 = vst [vmem:[#allocation7 + $0xc] sm:$0xf] %v375
    %392 = vst [vmem:[#allocation7 + $0x10] sm:$0xf] %v376
    %393 = vst [vmem:[#allocation7 + $0x14] sm:$0xf] %v377
    %394 = vst [vmem:[#allocation7 + $0x18] sm:$0xf] %v378
    %395 = vst [vmem:[#allocation7 + $0x1c] sm:$0xf] %v379
    %396 = vst [vmem:[#allocation7 + $0x20] sm:$0xf] %v380
    %397 = vst [vmem:[#allocation7 + $0x24] sm:$0xf] %v381
    %398 = vst [vmem:[#allocation7 + $0x28] sm:$0xf] %v382
    %399 = vst [vmem:[#allocation7 + $0x2c] sm:$0xf] %v383
    %400 = vst [vmem:[#allocation7 + $0x30] sm:$0xf] %v384
    %401 = vst [vmem:[#allocation7 + $0x34] sm:$0xf] %v385
    %402 = vst [vmem:[#allocation7 + $0x38] sm:$0xf] %v386
    %403 = vst [vmem:[#allocation7 + $0x3c] sm:$0xf] %v387
    // Predicated region
    $region22: #{tpu_custom_call.1} parent=1 // pred_check
      _
    $region23: #{tpu_custom_call.1} parent=1 // pred_check_branch
      %405 = sbr.rel (0) target = $region25
    $region24: #{tpu_custom_call.1} parent=1 // pred_region
      %s407 = ssub.s32 1024, 1024
      %408 = vsyncadd [#allocation4], %s407
      %s409 = sshll.u32 [#allocation7], 4
      %s410 = int_to_ptr.vmem [resolvable:$true] %s409
      %415 = dma.vmem_to_hbm [thread:$0]  %s410, 1024, %s3, [#allocation4], 64, 64, 4
    $region25: #{tpu_custom_call.1} parent=1 // pred_fallthru
      _
    // Predicated region
    $region26: #{tpu_custom_call.1} parent=1 // pred_check
      _
    $region27: #{tpu_custom_call.1} parent=1 // pred_check_branch
      %417 = sbr.rel (0) target = $region29
    $region28: #{tpu_custom_call.1} parent=1 // pred_region
      %418 = dma.done [#allocation4], 1024
    $region29: #{tpu_custom_call.1} parent=1 // pred_fallthru
      _
    %419 = vsyncpa [#allocation3], 1
    %420 = vsyncpa [#allocation6], 1
    %421 = vsyncpa [#allocation4], 1

</llo_original>
